<compile_context>
chip_gen: v6e
topology: v6e:2x2x1
jax: 0.10.0
libtpu: 0.0.40
codegen_flags: <defaults>
</compile_context>

<pallas_src>
import functools

import jax
import jax.numpy as jnp
from jax.experimental import pallas as pl
from jax.experimental.pallas import tpu as pltpu

_LANES = 128
_SUBLANES = 8
_MAX_BLOCK_ROWS = 2048  # ~1 MiB input block + ~1.5 MiB output blocks at f32


def _round_up(x: int, m: int) -> int:
    return ((x + m - 1) // m) * m


def _tiling(rows: int):
    """Pick (block_rows, padded_rows, n_blocks) for a lane-dense [rows,128] slab."""
    if rows <= _MAX_BLOCK_ROWS:
        # Single-block fast path (default 500x24 lands here): grid-level knobs
        # are inert at this size, so keep it trivial.
        block_rows = _round_up(max(rows, _SUBLANES), _SUBLANES)
        return block_rows, block_rows, 1
    # Large F*S: at least 2 blocks (even count so a 2-TC chip can shard the
    # axis); block_rows chosen so residual padding stays small.
    n_blocks = _round_up(pl.cdiv(rows, _MAX_BLOCK_ROWS), 2)
    block_rows = _round_up(pl.cdiv(rows, n_blocks), _SUBLANES)
    return block_rows, block_rows * n_blocks, n_blocks


def _abg_kernel(r_ref, alpha_ref, beta_ref, gamma_ref):
    """r_ref: (2, block_rows, 128) uniforms in [0,1).  Write-mostly kernel."""
    r1 = r_ref[0]
    r2 = r_ref[1]
    r1_sqrt = jnp.sqrt(r1)
    gamma = r1_sqrt * r2
    alpha_ref[...] = 1.0 - r1_sqrt
    beta_ref[...] = r1_sqrt - gamma  # == sqrt(r1) * (1 - r2), one fewer mul
    gamma_ref[...] = gamma


@functools.partial(jax.jit, static_argnums=(0, 1))
def alpha_beta_gamma_init(num_faces: int, num_samples: int, key):
    """Returns (alpha, beta, gamma), each [num_faces, num_samples] float32."""
    n = num_faces * num_samples
    rows = pl.cdiv(n, _LANES)
    block_rows, padded_rows, n_blocks = _tiling(rows)

    # Uniforms generated host-side JAX (lane-dense, padded); padding rows are
    # junk uniforms that get sliced off below.
    r1_r2 = jax.random.uniform(key, (2, padded_rows, _LANES), dtype=jnp.float32)

    out_block = pl.BlockSpec((block_rows, _LANES), lambda i: (i, 0))
    alpha_p, beta_p, gamma_p = pl.pallas_call(
        _abg_kernel,
        out_shape=(jax.ShapeDtypeStruct((padded_rows, _LANES), jnp.float32),) * 3,
        grid=(n_blocks,),
        in_specs=[pl.BlockSpec((2, block_rows, _LANES), lambda i: (0, i, 0))],
        out_specs=(out_block, out_block, out_block),
        compiler_params=pltpu.CompilerParams(
            dimension_semantics=("parallel",),
            vmem_limit_bytes=32 * 1024 * 1024,
        ),
    )(r1_r2)

    def unpad(x):
        return x.reshape(padded_rows * _LANES)[:n].reshape(num_faces, num_samples)

    return unpad(alpha_p), unpad(beta_p), unpad(gamma_p)


class AlphaBetaGammaJax:
    """JAX/Pallas port of the PyTorch AlphaBetaGamma module."""

    def __init__(self, num_faces=500, num_samples=24, key=None):
        self.num_faces = num_faces
        self.num_samples = num_samples
        if key is None:
            key = jax.random.PRNGKey(0)
        self.alpha, self.beta, self.gamma = alpha_beta_gamma_init(
            num_faces, num_samples, key
        )

    def forward(self):
        # torch.stack(..., 0).unsqueeze(1) then unpack == each param with a
        # leading singleton dim: [1, num_faces, num_samples].
        return (
            self.alpha[None, :, :],
            self.beta[None, :, :],
            self.gamma[None, :, :],
        )

    __call__ = forward


def _check(module, num_faces, num_samples):
    alpha, beta, gamma = module()
    jax.block_until_ready((alpha, beta, gamma))
    assert alpha.shape == (1, num_faces, num_samples)
    assert beta.shape == (1, num_faces, num_samples)
    assert gamma.shape == (1, num_faces, num_samples)
    s = alpha + beta + gamma
    assert jnp.allclose(s, jnp.ones_like(s), atol=1e-6)
    for v in (alpha, beta, gamma):
        assert bool(jnp.all(v >= 0.0)) and bool(jnp.all(v <= 1.0))


if __name__ == "__main__":
    key = jax.random.PRNGKey(0)
    k1, k2 = jax.random.split(key)

    # Small shape exercises the sub-tile padding path.
    _check(AlphaBetaGammaJax(num_faces=16, num_samples=24, key=k1), 16, 24)
    # Module default shape (single-block fast path: rows = 94 -> 96).
    _check(AlphaBetaGammaJax(num_faces=500, num_samples=24, key=k2), 500, 24)

    print("KERNEL_OK")
</pallas_src>

<mosaic_0001>
module attributes {stable_mosaic.version = 11 : i64} {
  func.func @_abg_kernel(%arg0: i32, %arg1: memref<2x8x128xf32, #tpu.memory_space<vmem>>, %arg2: memref<8x128xf32, #tpu.memory_space<vmem>>, %arg3: memref<8x128xf32, #tpu.memory_space<vmem>>, %arg4: memref<8x128xf32, #tpu.memory_space<vmem>>) attributes {dimension_semantics = [#tpu.dimension_semantics<parallel>], iteration_bounds = array<i64: 1>, scalar_prefetch = 0 : i64, scratch_operands = 0 : i64, tpu.core_type = #tpu.core_type<tc>, window_params = [{transform_indices = @transform_0, window_bounds = array<i64: 2, 8, 128>}, {transform_indices = @transform_1, window_bounds = array<i64: 8, 128>}, {transform_indices = @transform_2, window_bounds = array<i64: 8, 128>}, {transform_indices = @transform_3, window_bounds = array<i64: 8, 128>}]} {
    %c0 = arith.constant 0 : index
    %c0_0 = arith.constant 0 : index
    %c0_1 = arith.constant 0 : index
    %0 = vector.load %arg1[%c0, %c0_0, %c0_1] : memref<2x8x128xf32, #tpu.memory_space<vmem>>, vector<1x8x128xf32>
    %1 = vector.shape_cast %0 : vector<1x8x128xf32> to vector<8x128xf32>
    %c1 = arith.constant 1 : index
    %c0_2 = arith.constant 0 : index
    %c0_3 = arith.constant 0 : index
    %2 = vector.load %arg1[%c1, %c0_2, %c0_3] : memref<2x8x128xf32, #tpu.memory_space<vmem>>, vector<1x8x128xf32>
    %3 = vector.shape_cast %2 : vector<1x8x128xf32> to vector<8x128xf32>
    %4 = math.sqrt %1 : vector<8x128xf32>
    %5 = arith.mulf %4, %3 : vector<8x128xf32>
    %cst = arith.constant 1.000000e+00 : f32
    %6 = vector.broadcast %cst : f32 to vector<8x128xf32>
    %7 = arith.subf %6, %4 : vector<8x128xf32>
    %c0_4 = arith.constant 0 : index
    %c0_5 = arith.constant 0 : index
    %8 = vector.load %arg2[%c0_4, %c0_5] : memref<8x128xf32, #tpu.memory_space<vmem>>, vector<8x128xf32>
    tpu.vector_store %arg2[%c0_4, %c0_5], %7 {strides = array<i32>} : memref<8x128xf32, #tpu.memory_space<vmem>>, vector<8x128xf32>,
    %9 = arith.subf %4, %5 : vector<8x128xf32>
    %c0_6 = arith.constant 0 : index
    %c0_7 = arith.constant 0 : index
    %10 = vector.load %arg3[%c0_6, %c0_7] : memref<8x128xf32, #tpu.memory_space<vmem>>, vector<8x128xf32>
    tpu.vector_store %arg3[%c0_6, %c0_7], %9 {strides = array<i32>} : memref<8x128xf32, #tpu.memory_space<vmem>>, vector<8x128xf32>,
    %c0_8 = arith.constant 0 : index
    %c0_9 = arith.constant 0 : index
    %11 = vector.load %arg4[%c0_8, %c0_9] : memref<8x128xf32, #tpu.memory_space<vmem>>, vector<8x128xf32>
    tpu.vector_store %arg4[%c0_8, %c0_9], %5 {strides = array<i32>} : memref<8x128xf32, #tpu.memory_space<vmem>>, vector<8x128xf32>,
    return
  }
  func.func @transform_0(%arg0: i32) -> (i32, i32, i32) {
    %c0_i32 = arith.constant 0 : i32
    %c0_i32_0 = arith.constant 0 : i32
    %c0_i32_1 = arith.constant 0 : i32
    return %c0_i32, %arg0, %c0_i32_0 : i32, i32, i32
  }
  func.func @transform_1(%arg0: i32) -> (i32, i32) {
    %c0_i32 = arith.constant 0 : i32
    %c0_i32_0 = arith.constant 0 : i32
    return %arg0, %c0_i32 : i32, i32
  }
  func.func @transform_2(%arg0: i32) -> (i32, i32) {
    %c0_i32 = arith.constant 0 : i32
    %c0_i32_0 = arith.constant 0 : i32
    return %arg0, %c0_i32 : i32, i32
  }
  func.func @transform_3(%arg0: i32) -> (i32, i32) {
    %c0_i32 = arith.constant 0 : i32
    %c0_i32_0 = arith.constant 0 : i32
    return %arg0, %c0_i32 : i32, i32
  }
}

</mosaic_0001>

<llo_original>
// kernel: alpha_beta_gamma_init.1
$region0: #{alpha_beta_gamma_init.1}
  #allocation0 [shape = 'u32[]', space=smem, size = 0x4, offset = 0x4, fixed_abs, tag = 'smem constant byte address 0x4 - core index']
  #allocation1 [shape = 'u32[144,128]{1,0:T(1,128)}', space=vmem, size = 0x12000, scoped, tag = 'internal scratch']
  %s0 = inlined_call_operand.vmem [shape: f32[2,8,128], index: 0, kind: input, shape index: {}]
  %s1 = inlined_call_operand.vmem [shape: f32[8,128], index: 1, kind: output, shape index: {0}]
  %s2 = inlined_call_operand.vmem [shape: f32[8,128], index: 2, kind: output, shape index: {1}]
  %s3 = inlined_call_operand.vmem [shape: f32[8,128], index: 3, kind: output, shape index: {2}]
  %4 = xla_tuple %s1, %s2, %s3
  %s5 = sld [smem:[#allocation0]]
  $region30: #{alpha_beta_gamma_init.1} parent=0
    _
  %s7 = ssub.s32 1, %s5
  %s8 = scalar_select 0, %s7, %s5
  // Predicated region
  $region2: #{alpha_beta_gamma_init.1} parent=0 // pred_check
    _
  $region3: #{alpha_beta_gamma_init.1} parent=0 // pred_check_branch
    %10 = sbr.rel (0) target = $region5
  $region4: #{alpha_beta_gamma_init.1} parent=0 // pred_region
    _
  $region5: #{alpha_beta_gamma_init.1} parent=0 // pred_fallthru
    _
  %v11 = vld [vmem:[%s0] sm:$0xff]
  %s12 = scalar_lea.vmem %s0, 8
  %v13 = vld [vmem:[%s12] sm:$0xff]
  %v14 = vrsqrt.pop %v11
  %v15 = vmul.f32 %v11, %v14
  %vm16 = vcmp.eq.f32.partialorder %v11, inf
  %v17 = vsel %vm16, %v11, %v15
  %vm18 = vcmp.eq.f32.partialorder %v11, 0.0
  %v19 = vand.u32 %v11, 2147483648
  %v20 = vsel %vm18, %v19, %v17
  %v21 = vmul.f32 %v20, %v13
  %v22 = vsub.f32 1.0, %v20
  %23 = vst [vmem:[%s1] sm:$0xff] %v22
  %v24 = vsub.f32 %v20, %v21
  %25 = vst [vmem:[%s2] sm:$0xff] %v24
  %26 = vst [vmem:[%s3] sm:$0xff] %v21
  // Predicated region
  $region6: #{alpha_beta_gamma_init.1} parent=0 // pred_check
    _
  $region7: #{alpha_beta_gamma_init.1} parent=0 // pred_check_branch
    %28 = sbr.rel (0) target = $region9
  $region8: #{alpha_beta_gamma_init.1} parent=0 // pred_region
    _
  $region9: #{alpha_beta_gamma_init.1} parent=0 // pred_fallthru
    _
  // Predicated region
  $region10: #{alpha_beta_gamma_init.1} parent=0 // pred_check
    _
  $region11: #{alpha_beta_gamma_init.1} parent=0 // pred_check_branch
    %30 = sbr.rel (0) target = $region13
  $region12: #{alpha_beta_gamma_init.1} parent=0 // pred_region
    _
  $region13: #{alpha_beta_gamma_init.1} parent=0 // pred_fallthru
    _
  // Predicated region
  $region14: #{alpha_beta_gamma_init.1} parent=0 // pred_check
    _
  $region15: #{alpha_beta_gamma_init.1} parent=0 // pred_check_branch
    %32 = sbr.rel (0) target = $region17
  $region16: #{alpha_beta_gamma_init.1} parent=0 // pred_region
    _
  $region17: #{alpha_beta_gamma_init.1} parent=0 // pred_fallthru
    _
  // Predicated region
  $region18: #{alpha_beta_gamma_init.1} parent=0 // pred_check
    _
  $region19: #{alpha_beta_gamma_init.1} parent=0 // pred_check_branch
    %34 = sbr.rel (0) target = $region21
  $region20: #{alpha_beta_gamma_init.1} parent=0 // pred_region
    _
  $region21: #{alpha_beta_gamma_init.1} parent=0 // pred_fallthru
    _
  // Predicated region
  $region22: #{alpha_beta_gamma_init.1} parent=0 // pred_check
    _
  $region23: #{alpha_beta_gamma_init.1} parent=0 // pred_check_branch
    %36 = sbr.rel (0) target = $region25
  $region24: #{alpha_beta_gamma_init.1} parent=0 // pred_region
    _
  $region25: #{alpha_beta_gamma_init.1} parent=0 // pred_fallthru
    _
  // Predicated region
  $region26: #{alpha_beta_gamma_init.1} parent=0 // pred_check
    _
  $region27: #{alpha_beta_gamma_init.1} parent=0 // pred_check_branch
    %38 = sbr.rel (0) target = $region29
  $region28: #{alpha_beta_gamma_init.1} parent=0 // pred_region
    _
  $region29: #{alpha_beta_gamma_init.1} parent=0 // pred_fallthru
    _

</llo_original>
